<compile_context>
chip_gen: v6e
topology: v6e:2x2x1
jax: 0.10.0
libtpu: 0.0.40
codegen_flags: <defaults>
</compile_context>

<pallas_src>
import functools

import jax
import jax.numpy as jnp
from jax.experimental import pallas as pl
from jax.experimental.pallas import tpu as pltpu

# ----- model config (matches DenseResNet defaults) -----
DIM_IN = 3
DIM_OUT = 1
NUM_RESNET_BLOCKS = 3
NUM_LAYERS_PER_BLOCK = 2
NUM_NEURONS = 128

TN_MAX = 2048            # max batch-tile rows per grid step (multiple of 128)
SINGLE_TILE_MAX = 512    # batches up to this size use a single tile
OUT_PAD = max(8, ((DIM_OUT + 7) // 8) * 8)   # last-layer rows padded to a sublane multiple


def _round_up(n, m):
    return ((n + m - 1) // m) * m


def _bf16_activations_supported():
    """bf16 tanh/activations pay off on v6e/v7x (bf16 EUP/VPU); keep f32 on <= v5."""
    try:
        kind = jax.devices()[0].device_kind.lower()
    except Exception:
        return False
    for tag in ("v2", "v3", "v4", "v5"):
        if tag in kind:
            return False
    return True


BF16_ACT = _bf16_activations_supported()


def _choose_tile(n):
    """Pick (tile_rows, padded_rows).

    Large tiles amortize the ~0.35us per-grid-step overhead and weight reload; for big
    batches use an even number (>=2) of tiles so v7x's two TensorCores stay balanced.
    Multi-tile tiles are multiples of 128 so the lane-dense output blocks tile cleanly.
    """
    n = max(int(n), 1)
    if n <= SINGLE_TILE_MAX:
        tn = _round_up(n, 8)          # single tile; block dims equal the padded array dims
        return tn, tn
    num_tiles = max(2, -(-n // TN_MAX))
    if num_tiles % 2:
        num_tiles += 1
    tn = min(TN_MAX, _round_up(-(-n // num_tiles), 128))
    n_pad = _round_up(n, tn)
    return tn, n_pad


def dense_resnet_kernel(h0_ref, w_blocks_ref, b_blocks_ref,
                        w_lastT_ref, b_lastT_ref, o_ref, *, bf16_act):
    # Residual accumulator stays f32 for accuracy on all chips.
    h = h0_ref[...].astype(jnp.float32)                     # [TN, H]

    # ---- residual blocks: bf16 matmul operands, f32 accumulation ----
    for i in range(NUM_RESNET_BLOCKS):
        z = h.astype(jnp.bfloat16) if bf16_act else h
        for j in range(NUM_LAYERS_PER_BLOCK):
            w = w_blocks_ref[i, j]                           # [H, H] bf16 (beta folded)
            b = b_blocks_ref[i, j]                           # [1, H] f32  (beta folded)
            acc = jnp.dot(z.astype(jnp.bfloat16), w,
                          preferred_element_type=jnp.float32) + b
            # bf16 tanh on v6e/v7x (bf16 EUP; no per-layer f32->bf16 VPU cast);
            # f32 tanh on v5e and older (no bf16 VPU/EUP there).
            z = jnp.tanh(acc.astype(jnp.bfloat16)) if bf16_act else jnp.tanh(acc)
        h = z.astype(jnp.float32) + h                        # residual in f32

    # ---- last layer, lane-dense output ----
    # out[OUT_PAD, TN] = W_last^T(padded) @ h^T + b  (MXU matmul with transposed rhs);
    # avoids the (tn, 1) masked partial-store column writeback.
    out = jnp.dot(w_lastT_ref[...], h.T, preferred_element_type=jnp.float32)
    o_ref[...] = out + b_lastT_ref[...]


@jax.jit
def dense_resnet_forward(x, params):
    n = x.shape[0]
    if n == 0:
        return jnp.zeros((0, DIM_OUT), jnp.float32)

    tn, n_pad = _choose_tile(n)
    if n_pad != n:
        x = jnp.pad(x, ((0, n_pad - n), (0, 0)))

    # Fold beta/beta0 into weights & biases (exact; tune_beta=False -> all ones).
    beta0 = params["beta0"][0, 0]

    # First (K=3) layer hoisted into plain XLA: a lane-dense [n,128] activation is a far
    # better kernel input than a lane-sparse [n,3] tile; ~256-512 B/row extra DMA is
    # negligible vs ~200 KFLOP/row of in-kernel compute.
    h0 = jnp.tanh(beta0 * (x @ params["w_first"] + params["b_first"]))   # [n_pad, H] f32
    h0 = h0.astype(jnp.bfloat16) if BF16_ACT else h0

    beta = params["beta"][:, :, None, None]
    w_blocks = (params["w_blocks"] * beta).astype(jnp.bfloat16)          # [NB,NL,H,H] bf16
    b_blocks = params["b_blocks"] * beta                                 # [NB,NL,1,H] f32

    # Last layer packed as [OUT_PAD, H] (rows >= DIM_OUT are zero) so the kernel writes a
    # sublane-aligned, lane-dense [OUT_PAD, tn] output slab.
    w_lastT = jnp.zeros((OUT_PAD, NUM_NEURONS), jnp.float32
                        ).at[:DIM_OUT].set(params["w_last"].T)
    b_lastT = jnp.zeros((OUT_PAD, 1), jnp.float32
                        ).at[:DIM_OUT].set(params["b_last"].T)

    const = lambda nd: (lambda i: (0,) * nd)
    grid = (n_pad // tn,)

    out_pad = pl.pallas_call(
        functools.partial(dense_resnet_kernel, bf16_act=BF16_ACT),
        out_shape=jax.ShapeDtypeStruct((OUT_PAD, n_pad), jnp.float32),
        grid=grid,
        in_specs=[
            pl.BlockSpec((tn, NUM_NEURONS), lambda i: (i, 0)),   # h0 (batch-tiled)
            pl.BlockSpec(w_blocks.shape, const(4)),              # VMEM-resident weights
            pl.BlockSpec(b_blocks.shape, const(4)),
            pl.BlockSpec(w_lastT.shape, const(2)),
            pl.BlockSpec(b_lastT.shape, const(2)),
        ],
        out_specs=pl.BlockSpec((OUT_PAD, tn), lambda i: (0, i)),  # lane-dense output slab
        compiler_params=pltpu.CompilerParams(
            dimension_semantics=("parallel",),
            vmem_limit_bytes=32 * 1024 * 1024,
        ),
    )(h0, w_blocks, b_blocks, w_lastT, b_lastT)

    return out_pad[:DIM_OUT, :n].T


def init_params(key):
    """Deterministic init mimicking nn.Linear's U(-1/sqrt(fan_in), 1/sqrt(fan_in))."""
    ks = jax.random.split(key, 6)

    def linear(k, fan_in, fan_out):
        kw, kb = jax.random.split(k)
        bound = 1.0 / jnp.sqrt(fan_in)
        w = jax.random.uniform(kw, (fan_in, fan_out), jnp.float32, -bound, bound)
        b = jax.random.uniform(kb, (1, fan_out), jnp.float32, -bound, bound)
        return w, b

    w_first, b_first = linear(ks[0], DIM_IN, NUM_NEURONS)
    w_last, b_last = linear(ks[1], NUM_NEURONS, DIM_OUT)

    blk_keys = jax.random.split(ks[2], NUM_RESNET_BLOCKS * NUM_LAYERS_PER_BLOCK)
    w_blocks, b_blocks = [], []
    for k in blk_keys:
        w, b = linear(k, NUM_NEURONS, NUM_NEURONS)
        w_blocks.append(w)
        b_blocks.append(b)
    w_blocks = jnp.stack(w_blocks).reshape(
        NUM_RESNET_BLOCKS, NUM_LAYERS_PER_BLOCK, NUM_NEURONS, NUM_NEURONS)
    b_blocks = jnp.stack(b_blocks).reshape(
        NUM_RESNET_BLOCKS, NUM_LAYERS_PER_BLOCK, 1, NUM_NEURONS)

    # tune_beta=False -> fixed ones (kept as explicit tensors for fidelity)
    beta0 = jnp.ones((1, 1), jnp.float32)
    beta = jnp.ones((NUM_RESNET_BLOCKS, NUM_LAYERS_PER_BLOCK), jnp.float32)

    return dict(w_first=w_first, b_first=b_first,
                w_blocks=w_blocks, b_blocks=b_blocks,
                w_last=w_last, b_last=b_last,
                beta0=beta0, beta=beta)


def dense_resnet_reference(x, p):
    """Pure-JAX f32 reference reproducing the PyTorch forward."""
    h = jnp.tanh(p["beta0"][0, 0] * (x @ p["w_first"] + p["b_first"]))
    for i in range(NUM_RESNET_BLOCKS):
        z = h
        for j in range(NUM_LAYERS_PER_BLOCK):
            z = jnp.tanh(p["beta"][i, j] * (z @ p["w_blocks"][i, j] + p["b_blocks"][i, j]))
        h = z + h
    return h @ p["w_last"] + p["b_last"]


if __name__ == "__main__":
    key = jax.random.PRNGKey(0)
    k_param, k_x = jax.random.split(key)
    params = init_params(k_param)

    # bf16 matmuls (and bf16 tanh on v6e/v7x) vs f32 reference -> loose tolerance.
    tol = dict(atol=3e-2, rtol=3e-2) if BF16_ACT else dict(atol=1e-2, rtol=1e-2)

    # N=8 exercises the single-tile path; N=700 exercises the padded multi-tile
    # (two-TensorCore) path.
    for N in (8, 700):
        x = jax.random.normal(jax.random.fold_in(k_x, N), (N, DIM_IN), jnp.float32)
        out = jax.block_until_ready(dense_resnet_forward(x, params))
        ref = dense_resnet_reference(x, params)
        assert out.shape == (N, DIM_OUT)
        assert jnp.allclose(out, ref, **tol), f"mismatch vs JAX reference at N={N}"

    print("KERNEL_OK")
</pallas_src>

<mosaic_0001>
module attributes {stable_mosaic.version = 11 : i64} {
  func.func @dense_resnet_kernel(%arg0: i32, %arg1: memref<8x128xbf16, #tpu.memory_space<vmem>>, %arg2: memref<3x2x128x128xbf16, #tpu.memory_space<vmem>>, %arg3: memref<3x2x1x128xf32, #tpu.memory_space<vmem>>, %arg4: memref<8x128xf32, #tpu.memory_space<vmem>>, %arg5: memref<8x1xf32, #tpu.memory_space<vmem>>, %arg6: memref<8x8xf32, #tpu.memory_space<vmem>>) attributes {dimension_semantics = [#tpu.dimension_semantics<parallel>], iteration_bounds = array<i64: 1>, scalar_prefetch = 0 : i64, scratch_operands = 0 : i64, tpu.core_type = #tpu.core_type<tc>, window_params = [{transform_indices = @transform_0, window_bounds = array<i64: 8, 128>}, {pipeline_mode = #tpu.pipeline_mode<synchronous>, transform_indices = @transform_1, window_bounds = array<i64: 3, 2, 128, 128>}, {pipeline_mode = #tpu.pipeline_mode<synchronous>, transform_indices = @transform_2, window_bounds = array<i64: 3, 2, 1, 128>}, {pipeline_mode = #tpu.pipeline_mode<synchronous>, transform_indices = @transform_3, window_bounds = array<i64: 8, 128>}, {pipeline_mode = #tpu.pipeline_mode<synchronous>, transform_indices = @transform_4, window_bounds = array<i64: 8, 1>}, {transform_indices = @transform_5, window_bounds = array<i64: 8, 8>}]} {
    %c0 = arith.constant 0 : index
    %c0_0 = arith.constant 0 : index
    %0 = vector.load %arg1[%c0, %c0_0] : memref<8x128xbf16, #tpu.memory_space<vmem>>, vector<8x128xbf16>
    %1 = arith.extf %0 : vector<8x128xbf16> to vector<8x128xf32>
    %2 = arith.truncf %1 : vector<8x128xf32> to vector<8x128xbf16>
    %c0_1 = arith.constant 0 : index
    %c0_2 = arith.constant 0 : index
    %c0_3 = arith.constant 0 : index
    %c0_4 = arith.constant 0 : index
    %3 = vector.load %arg2[%c0_1, %c0_2, %c0_3, %c0_4] : memref<3x2x128x128xbf16, #tpu.memory_space<vmem>>, vector<1x1x128x128xbf16>
    %4 = vector.shape_cast %3 : vector<1x1x128x128xbf16> to vector<128x128xbf16>
    %c0_5 = arith.constant 0 : index
    %c0_6 = arith.constant 0 : index
    %c0_7 = arith.constant 0 : index
    %c0_8 = arith.constant 0 : index
    %5 = vector.load %arg3[%c0_5, %c0_6, %c0_7, %c0_8] : memref<3x2x1x128xf32, #tpu.memory_space<vmem>>, vector<1x1x1x128xf32>
    %6 = vector.shape_cast %5 : vector<1x1x1x128xf32> to vector<1x128xf32>
    %cst = arith.constant dense<0.000000e+00> : vector<8x128xf32>
    %7 = tpu.matmul %2, %4, %cst {dimension_numbers = #tpu.dot_dimension_numbers<[1], [0], [0], [1], [0, 0, 1, 1], [], []>} : vector<8x128xbf16>, vector<128x128xbf16>, vector<8x128xf32> -> vector<8x128xf32>
    %8 = vector.broadcast %6 : vector<1x128xf32> to vector<8x128xf32>
    %9 = arith.addf %7, %8 : vector<8x128xf32>
    %10 = arith.truncf %9 : vector<8x128xf32> to vector<8x128xbf16>
    %11 = math.tanh %10 : vector<8x128xbf16>
    %c0_9 = arith.constant 0 : index
    %c1 = arith.constant 1 : index
    %c0_10 = arith.constant 0 : index
    %c0_11 = arith.constant 0 : index
    %12 = vector.load %arg2[%c0_9, %c1, %c0_10, %c0_11] : memref<3x2x128x128xbf16, #tpu.memory_space<vmem>>, vector<1x1x128x128xbf16>
    %13 = vector.shape_cast %12 : vector<1x1x128x128xbf16> to vector<128x128xbf16>
    %c0_12 = arith.constant 0 : index
    %c1_13 = arith.constant 1 : index
    %c0_14 = arith.constant 0 : index
    %c0_15 = arith.constant 0 : index
    %14 = vector.load %arg3[%c0_12, %c1_13, %c0_14, %c0_15] : memref<3x2x1x128xf32, #tpu.memory_space<vmem>>, vector<1x1x1x128xf32>
    %15 = vector.shape_cast %14 : vector<1x1x1x128xf32> to vector<1x128xf32>
    %cst_16 = arith.constant dense<0.000000e+00> : vector<8x128xf32>
    %16 = tpu.matmul %11, %13, %cst_16 {dimension_numbers = #tpu.dot_dimension_numbers<[1], [0], [0], [1], [0, 0, 1, 1], [], []>} : vector<8x128xbf16>, vector<128x128xbf16>, vector<8x128xf32> -> vector<8x128xf32>
    %17 = vector.broadcast %15 : vector<1x128xf32> to vector<8x128xf32>
    %18 = arith.addf %16, %17 : vector<8x128xf32>
    %19 = arith.truncf %18 : vector<8x128xf32> to vector<8x128xbf16>
    %20 = math.tanh %19 : vector<8x128xbf16>
    %21 = arith.extf %20 : vector<8x128xbf16> to vector<8x128xf32>
    %22 = arith.addf %21, %1 : vector<8x128xf32>
    %23 = arith.truncf %22 : vector<8x128xf32> to vector<8x128xbf16>
    %c1_17 = arith.constant 1 : index
    %c0_18 = arith.constant 0 : index
    %c0_19 = arith.constant 0 : index
    %c0_20 = arith.constant 0 : index
    %24 = vector.load %arg2[%c1_17, %c0_18, %c0_19, %c0_20] : memref<3x2x128x128xbf16, #tpu.memory_space<vmem>>, vector<1x1x128x128xbf16>
    %25 = vector.shape_cast %24 : vector<1x1x128x128xbf16> to vector<128x128xbf16>
    %c1_21 = arith.constant 1 : index
    %c0_22 = arith.constant 0 : index
    %c0_23 = arith.constant 0 : index
    %c0_24 = arith.constant 0 : index
    %26 = vector.load %arg3[%c1_21, %c0_22, %c0_23, %c0_24] : memref<3x2x1x128xf32, #tpu.memory_space<vmem>>, vector<1x1x1x128xf32>
    %27 = vector.shape_cast %26 : vector<1x1x1x128xf32> to vector<1x128xf32>
    %cst_25 = arith.constant dense<0.000000e+00> : vector<8x128xf32>
    %28 = tpu.matmul %23, %25, %cst_25 {dimension_numbers = #tpu.dot_dimension_numbers<[1], [0], [0], [1], [0, 0, 1, 1], [], []>} : vector<8x128xbf16>, vector<128x128xbf16>, vector<8x128xf32> -> vector<8x128xf32>
    %29 = vector.broadcast %27 : vector<1x128xf32> to vector<8x128xf32>
    %30 = arith.addf %28, %29 : vector<8x128xf32>
    %31 = arith.truncf %30 : vector<8x128xf32> to vector<8x128xbf16>
    %32 = math.tanh %31 : vector<8x128xbf16>
    %c1_26 = arith.constant 1 : index
    %c1_27 = arith.constant 1 : index
    %c0_28 = arith.constant 0 : index
    %c0_29 = arith.constant 0 : index
    %33 = vector.load %arg2[%c1_26, %c1_27, %c0_28, %c0_29] : memref<3x2x128x128xbf16, #tpu.memory_space<vmem>>, vector<1x1x128x128xbf16>
    %34 = vector.shape_cast %33 : vector<1x1x128x128xbf16> to vector<128x128xbf16>
    %c1_30 = arith.constant 1 : index
    %c1_31 = arith.constant 1 : index
    %c0_32 = arith.constant 0 : index
    %c0_33 = arith.constant 0 : index
    %35 = vector.load %arg3[%c1_30, %c1_31, %c0_32, %c0_33] : memref<3x2x1x128xf32, #tpu.memory_space<vmem>>, vector<1x1x1x128xf32>
    %36 = vector.shape_cast %35 : vector<1x1x1x128xf32> to vector<1x128xf32>
    %cst_34 = arith.constant dense<0.000000e+00> : vector<8x128xf32>
    %37 = tpu.matmul %32, %34, %cst_34 {dimension_numbers = #tpu.dot_dimension_numbers<[1], [0], [0], [1], [0, 0, 1, 1], [], []>} : vector<8x128xbf16>, vector<128x128xbf16>, vector<8x128xf32> -> vector<8x128xf32>
    %38 = vector.broadcast %36 : vector<1x128xf32> to vector<8x128xf32>
    %39 = arith.addf %37, %38 : vector<8x128xf32>
    %40 = arith.truncf %39 : vector<8x128xf32> to vector<8x128xbf16>
    %41 = math.tanh %40 : vector<8x128xbf16>
    %42 = arith.extf %41 : vector<8x128xbf16> to vector<8x128xf32>
    %43 = arith.addf %42, %22 : vector<8x128xf32>
    %44 = arith.truncf %43 : vector<8x128xf32> to vector<8x128xbf16>
    %c2 = arith.constant 2 : index
    %c0_35 = arith.constant 0 : index
    %c0_36 = arith.constant 0 : index
    %c0_37 = arith.constant 0 : index
    %45 = vector.load %arg2[%c2, %c0_35, %c0_36, %c0_37] : memref<3x2x128x128xbf16, #tpu.memory_space<vmem>>, vector<1x1x128x128xbf16>
    %46 = vector.shape_cast %45 : vector<1x1x128x128xbf16> to vector<128x128xbf16>
    %c2_38 = arith.constant 2 : index
    %c0_39 = arith.constant 0 : index
    %c0_40 = arith.constant 0 : index
    %c0_41 = arith.constant 0 : index
    %47 = vector.load %arg3[%c2_38, %c0_39, %c0_40, %c0_41] : memref<3x2x1x128xf32, #tpu.memory_space<vmem>>, vector<1x1x1x128xf32>
    %48 = vector.shape_cast %47 : vector<1x1x1x128xf32> to vector<1x128xf32>
    %cst_42 = arith.constant dense<0.000000e+00> : vector<8x128xf32>
    %49 = tpu.matmul %44, %46, %cst_42 {dimension_numbers = #tpu.dot_dimension_numbers<[1], [0], [0], [1], [0, 0, 1, 1], [], []>} : vector<8x128xbf16>, vector<128x128xbf16>, vector<8x128xf32> -> vector<8x128xf32>
    %50 = vector.broadcast %48 : vector<1x128xf32> to vector<8x128xf32>
    %51 = arith.addf %49, %50 : vector<8x128xf32>
    %52 = arith.truncf %51 : vector<8x128xf32> to vector<8x128xbf16>
    %53 = math.tanh %52 : vector<8x128xbf16>
    %c2_43 = arith.constant 2 : index
    %c1_44 = arith.constant 1 : index
    %c0_45 = arith.constant 0 : index
    %c0_46 = arith.constant 0 : index
    %54 = vector.load %arg2[%c2_43, %c1_44, %c0_45, %c0_46] : memref<3x2x128x128xbf16, #tpu.memory_space<vmem>>, vector<1x1x128x128xbf16>
    %55 = vector.shape_cast %54 : vector<1x1x128x128xbf16> to vector<128x128xbf16>
    %c2_47 = arith.constant 2 : index
    %c1_48 = arith.constant 1 : index
    %c0_49 = arith.constant 0 : index
    %c0_50 = arith.constant 0 : index
    %56 = vector.load %arg3[%c2_47, %c1_48, %c0_49, %c0_50] : memref<3x2x1x128xf32, #tpu.memory_space<vmem>>, vector<1x1x1x128xf32>
    %57 = vector.shape_cast %56 : vector<1x1x1x128xf32> to vector<1x128xf32>
    %cst_51 = arith.constant dense<0.000000e+00> : vector<8x128xf32>
    %58 = tpu.matmul %53, %55, %cst_51 {dimension_numbers = #tpu.dot_dimension_numbers<[1], [0], [0], [1], [0, 0, 1, 1], [], []>} : vector<8x128xbf16>, vector<128x128xbf16>, vector<8x128xf32> -> vector<8x128xf32>
    %59 = vector.broadcast %57 : vector<1x128xf32> to vector<8x128xf32>
    %60 = arith.addf %58, %59 : vector<8x128xf32>
    %61 = arith.truncf %60 : vector<8x128xf32> to vector<8x128xbf16>
    %62 = math.tanh %61 : vector<8x128xbf16>
    %63 = arith.extf %62 : vector<8x128xbf16> to vector<8x128xf32>
    %64 = arith.addf %63, %43 : vector<8x128xf32>
    %c0_52 = arith.constant 0 : index
    %c0_53 = arith.constant 0 : index
    %65 = vector.load %arg4[%c0_52, %c0_53] : memref<8x128xf32, #tpu.memory_space<vmem>>, vector<8x128xf32>
    %66 = tpu.transpose %64, [1, 0] : vector<8x128xf32> -> vector<128x8xf32>
    %cst_54 = arith.constant dense<0.000000e+00> : vector<8x8xf32>
    %67 = tpu.matmul %65, %66, %cst_54 {dimension_numbers = #tpu.dot_dimension_numbers<[1], [0], [0], [1], [0, 0, 1, 1], [], []>} : vector<8x128xf32>, vector<128x8xf32>, vector<8x8xf32> -> vector<8x8xf32>
    %c0_55 = arith.constant 0 : index
    %c0_56 = arith.constant 0 : index
    %68 = vector.load %arg5[%c0_55, %c0_56] : memref<8x1xf32, #tpu.memory_space<vmem>>, vector<8x1xf32>
    %69 = vector.broadcast %68 : vector<8x1xf32> to vector<8x8xf32>
    %70 = arith.addf %67, %69 : vector<8x8xf32>
    %c0_57 = arith.constant 0 : index
    %c0_58 = arith.constant 0 : index
    %71 = vector.load %arg6[%c0_57, %c0_58] : memref<8x8xf32, #tpu.memory_space<vmem>>, vector<8x8xf32>
    tpu.vector_store %arg6[%c0_57, %c0_58], %70 {strides = array<i32>} : memref<8x8xf32, #tpu.memory_space<vmem>>, vector<8x8xf32>,
    return
  }
  func.func @transform_0(%arg0: i32) -> (i32, i32) {
    %c0_i32 = arith.constant 0 : i32
    %c0_i32_0 = arith.constant 0 : i32
    return %arg0, %c0_i32 : i32, i32
  }
  func.func @transform_1(%arg0: i32) -> (i32, i32, i32, i32) {
    %c0_i32 = arith.constant 0 : i32
    %c0_i32_0 = arith.constant 0 : i32
    %c0_i32_1 = arith.constant 0 : i32
    %c0_i32_2 = arith.constant 0 : i32
    %c0_i32_3 = arith.constant 0 : i32
    return %c0_i32, %c0_i32_0, %c0_i32_1, %c0_i32_2 : i32, i32, i32, i32
  }
  func.func @transform_2(%arg0: i32) -> (i32, i32, i32, i32) {
    %c0_i32 = arith.constant 0 : i32
    %c0_i32_0 = arith.constant 0 : i32
    %c0_i32_1 = arith.constant 0 : i32
    %c0_i32_2 = arith.constant 0 : i32
    %c0_i32_3 = arith.constant 0 : i32
    return %c0_i32, %c0_i32_0, %c0_i32_1, %c0_i32_2 : i32, i32, i32, i32
  }
  func.func @transform_3(%arg0: i32) -> (i32, i32) {
    %c0_i32 = arith.constant 0 : i32
    %c0_i32_0 = arith.constant 0 : i32
    %c0_i32_1 = arith.constant 0 : i32
    return %c0_i32, %c0_i32_0 : i32, i32
  }
  func.func @transform_4(%arg0: i32) -> (i32, i32) {
    %c0_i32 = arith.constant 0 : i32
    %c0_i32_0 = arith.constant 0 : i32
    %c0_i32_1 = arith.constant 0 : i32
    return %c0_i32, %c0_i32_0 : i32, i32
  }
  func.func @transform_5(%arg0: i32) -> (i32, i32) {
    %c0_i32 = arith.constant 0 : i32
    %c0_i32_0 = arith.constant 0 : i32
    return %c0_i32, %arg0 : i32, i32
  }
}

</mosaic_0001>

<llo_original>
// kernel: dense_resnet_forward.1
$region0: #{dense_resnet_forward.1}
  #allocation0 [shape = 'u32[]', space=smem, size = 0x4, offset = 0x4, fixed_abs, tag = 'smem constant byte address 0x4 - core index']
  #allocation1 [shape = 'u32[144,128]{1,0:T(1,128)}', space=vmem, size = 0x12000, scoped, tag = 'internal scratch']
  %s0 = inlined_call_operand.vmem [shape: bf16[8,128], index: 0, kind: input, shape index: {}]
  %s1 = inlined_call_operand.vmem [shape: bf16[3,2,128,128], index: 1, kind: input, shape index: {}]
  %s2 = inlined_call_operand.vmem [shape: f32[3,2,1,128], index: 2, kind: input, shape index: {}]
  %s3 = inlined_call_operand.vmem [shape: f32[8,128], index: 3, kind: input, shape index: {}]
  %s4 = inlined_call_operand.vmem [shape: f32[8,1], index: 4, kind: input, shape index: {}]
  %s5 = inlined_call_operand.vmem [shape: f32[8,8], index: 5, kind: output, shape index: {}]
  %s6 = sld [smem:[#allocation0]]
  $region30: #{dense_resnet_forward.1} parent=0
    _
  %s8 = ssub.s32 1, %s6
  %s9 = scalar_select 0, %s8, %s6
  // Predicated region
  $region2: #{dense_resnet_forward.1} parent=0 // pred_check
    _
  $region3: #{dense_resnet_forward.1} parent=0 // pred_check_branch
    %11 = sbr.rel (0) target = $region5
  $region4: #{dense_resnet_forward.1} parent=0 // pred_region
    _
  $region5: #{dense_resnet_forward.1} parent=0 // pred_fallthru
    _
  // Predicated region
  $region6: #{dense_resnet_forward.1} parent=0 // pred_check
    _
  $region7: #{dense_resnet_forward.1} parent=0 // pred_check_branch
    %13 = sbr.rel (0) target = $region9
  $region8: #{dense_resnet_forward.1} parent=0 // pred_region
    _
  $region9: #{dense_resnet_forward.1} parent=0 // pred_fallthru
    _
  // Predicated region
  $region10: #{dense_resnet_forward.1} parent=0 // pred_check
    _
  $region11: #{dense_resnet_forward.1} parent=0 // pred_check_branch
    %15 = sbr.rel (0) target = $region13
  $region12: #{dense_resnet_forward.1} parent=0 // pred_region
    _
  $region13: #{dense_resnet_forward.1} parent=0 // pred_fallthru
    _
  // Predicated region
  $region14: #{dense_resnet_forward.1} parent=0 // pred_check
    _
  $region15: #{dense_resnet_forward.1} parent=0 // pred_check_branch
    %17 = sbr.rel (0) target = $region17
  $region16: #{dense_resnet_forward.1} parent=0 // pred_region
    _
  $region17: #{dense_resnet_forward.1} parent=0 // pred_fallthru
    _
  // Predicated region
  $region18: #{dense_resnet_forward.1} parent=0 // pred_check
    _
  $region19: #{dense_resnet_forward.1} parent=0 // pred_check_branch
    %19 = sbr.rel (0) target = $region21
  $region20: #{dense_resnet_forward.1} parent=0 // pred_region
    _
  $region21: #{dense_resnet_forward.1} parent=0 // pred_fallthru
    _
  %v21 = vld [vmem:[%s0] sm:$0xf]
  %v22 = vunpack.c.l.bf16 %v21
  %v23 = vld [vmem:[%s1] sm:$0xf]
  %v24 = vld [vmem:[%s1 + $0x4] sm:$0xf]
  %v25 = vld [vmem:[%s1 + $0x8] sm:$0xf]
  %v26 = vld [vmem:[%s1 + $0xc] sm:$0xf]
  %v27 = vld [vmem:[%s1 + $0x10] sm:$0xf]
  %v28 = vld [vmem:[%s1 + $0x14] sm:$0xf]
  %v29 = vld [vmem:[%s1 + $0x18] sm:$0xf]
  %v30 = vld [vmem:[%s1 + $0x1c] sm:$0xf]
  %v31 = vld [vmem:[%s1 + $0x20] sm:$0xf]
  %v32 = vld [vmem:[%s1 + $0x24] sm:$0xf]
  %v33 = vld [vmem:[%s1 + $0x28] sm:$0xf]
  %v34 = vld [vmem:[%s1 + $0x2c] sm:$0xf]
  %v35 = vld [vmem:[%s1 + $0x30] sm:$0xf]
  %v36 = vld [vmem:[%s1 + $0x34] sm:$0xf]
  %v37 = vld [vmem:[%s1 + $0x38] sm:$0xf]
  %v38 = vld [vmem:[%s1 + $0x3c] sm:$0xf]
  %v39 = vld [vmem:[%s2] sm:$0x1]
  %v41 = vlaneseq
  %v42 = vshrl.u32 %v41, 7
  %v43 = vsub.s32 0, %v42
  %v44 = vrot.slane %v39, %v43
  %v62 = vunpack.c.l.b16 %v23
  %v63 = vunpack.c.l.b16 %v24
  %v64 = vunpack.c.l.b16 %v25
  %v65 = vunpack.c.l.b16 %v26
  %v66 = vunpack.c.l.b16 %v27
  %v67 = vunpack.c.l.b16 %v28
  %v68 = vunpack.c.l.b16 %v29
  %v69 = vunpack.c.l.b16 %v30
  %v70 = vunpack.c.l.b16 %v31
  %v71 = vunpack.c.l.b16 %v32
  %v72 = vunpack.c.l.b16 %v33
  %v73 = vunpack.c.l.b16 %v34
  %v74 = vunpack.c.l.b16 %v35
  %v75 = vunpack.c.l.b16 %v36
  %v76 = vunpack.c.l.b16 %v37
  %v77 = vunpack.c.l.b16 %v38
  %v78 = vpack.c.b16 %v63, %v62
  %v79 = vpack.c.b16 %v65, %v64
  %v80 = vpack.c.b16 %v67, %v66
  %v81 = vpack.c.b16 %v69, %v68
  %v82 = vpack.c.b16 %v71, %v70
  %v83 = vpack.c.b16 %v73, %v72
  %v84 = vpack.c.b16 %v75, %v74
  %v85 = vpack.c.b16 %v77, %v76
  %94 = vmatprep.subr.bf16.mxu0 0
  %95 = vmatpush1.bf16.msra.mxu0 %v85
  %96 = vmatprep.subr.bf16.mxu0 0
  %97 = vmatpush1.bf16.msra.mxu0 %v84
  %98 = vmatprep.subr.bf16.mxu0 0
  %99 = vmatpush1.bf16.msra.mxu0 %v83
  %100 = vmatprep.subr.bf16.mxu0 0
  %101 = vmatpush1.bf16.msra.mxu0 %v82
  %102 = vmatprep.subr.bf16.mxu0 0
  %103 = vmatpush1.bf16.msra.mxu0 %v81
  %104 = vmatprep.subr.bf16.mxu0 0
  %105 = vmatpush1.bf16.msra.mxu0 %v80
  %106 = vmatprep.subr.bf16.mxu0 0
  %107 = vmatpush1.bf16.msra.mxu0 %v79
  %108 = vmatprep.subr.bf16.mxu0 0
  %109 = vmatpush1.bf16.msra.mxu0 %v78
  %110 = vmatprep.subr.bf16.mxu0 0
  %111 = vmatpush2.bf16.msra.mxu0 0
  %112 = vmatprep.subr.bf16.mxu0 0
  %113 = vmatpush2.bf16.msra.mxu0 0
  %114 = vmatprep.subr.bf16.mxu0 0
  %115 = vmatpush2.bf16.msra.mxu0 0
  %116 = vmatprep.subr.bf16.mxu0 0
  %117 = vmatpush2.bf16.msra.mxu0 0
  %118 = vmatprep.subr.bf16.mxu0 0
  %119 = vmatpush2.bf16.msra.mxu0 0
  %120 = vmatprep.subr.bf16.mxu0 0
  %121 = vmatpush2.bf16.msra.mxu0 0
  %122 = vmatprep.subr.bf16.mxu0 0
  %123 = vmatpush2.bf16.msra.mxu0 0
  %124 = vmatprep.subr.bf16.mxu0 0
  %125 = vmatpush2.bf16.msra.mxu0 0
  %126 = vmatprep.mubr.bf16.mxu0 0
  %127 = vmatmul.mubr.bf16.gmra.mxu0 %v21
  %v128 = vpop.f32.mrf.mxu0
  %v129 = vadd.f32 %v44, %v128
  %v130 = vpop.f32.mrf.mxu0
  %v131 = vpop.f32.mrf.mxu0
  %v132 = vpop.f32.mrf.mxu0
  %133 = vdwg.mxu0
  %v134 = vpack.c.bf16 %v129, %v129
  %v135 = vtanh.bf16.pop %v134
  %s136 = scalar_lea.vmem %s1, 64
  %v137 = vld [vmem:[%s136] sm:$0xf]
  %v138 = vld [vmem:[%s136 + $0x4] sm:$0xf]
  %v139 = vld [vmem:[%s136 + $0x8] sm:$0xf]
  %v140 = vld [vmem:[%s136 + $0xc] sm:$0xf]
  %v141 = vld [vmem:[%s136 + $0x10] sm:$0xf]
  %v142 = vld [vmem:[%s136 + $0x14] sm:$0xf]
  %v143 = vld [vmem:[%s136 + $0x18] sm:$0xf]
  %v144 = vld [vmem:[%s136 + $0x1c] sm:$0xf]
  %v145 = vld [vmem:[%s136 + $0x20] sm:$0xf]
  %v146 = vld [vmem:[%s136 + $0x24] sm:$0xf]
  %v147 = vld [vmem:[%s136 + $0x28] sm:$0xf]
  %v148 = vld [vmem:[%s136 + $0x2c] sm:$0xf]
  %v149 = vld [vmem:[%s136 + $0x30] sm:$0xf]
  %v150 = vld [vmem:[%s136 + $0x34] sm:$0xf]
  %v151 = vld [vmem:[%s136 + $0x38] sm:$0xf]
  %v152 = vld [vmem:[%s136 + $0x3c] sm:$0xf]
  %s153 = scalar_lea.vmem %s2, 1
  %v154 = vld [vmem:[%s153] sm:$0x1]
  %v156 = vlaneseq
  %v157 = vshrl.u32 %v156, 7
  %v158 = vsub.s32 0, %v157
  %v159 = vrot.slane %v154, %v158
  %v177 = vunpack.c.l.b16 %v137
  %v178 = vunpack.c.l.b16 %v138
  %v179 = vunpack.c.l.b16 %v139
  %v180 = vunpack.c.l.b16 %v140
  %v181 = vunpack.c.l.b16 %v141
  %v182 = vunpack.c.l.b16 %v142
  %v183 = vunpack.c.l.b16 %v143
  %v184 = vunpack.c.l.b16 %v144
  %v185 = vunpack.c.l.b16 %v145
  %v186 = vunpack.c.l.b16 %v146
  %v187 = vunpack.c.l.b16 %v147
  %v188 = vunpack.c.l.b16 %v148
  %v189 = vunpack.c.l.b16 %v149
  %v190 = vunpack.c.l.b16 %v150
  %v191 = vunpack.c.l.b16 %v151
  %v192 = vunpack.c.l.b16 %v152
  %v193 = vpack.c.b16 %v178, %v177
  %v194 = vpack.c.b16 %v180, %v179
  %v195 = vpack.c.b16 %v182, %v181
  %v196 = vpack.c.b16 %v184, %v183
  %v197 = vpack.c.b16 %v186, %v185
  %v198 = vpack.c.b16 %v188, %v187
  %v199 = vpack.c.b16 %v190, %v189
  %v200 = vpack.c.b16 %v192, %v191
  %209 = vmatprep.subr.bf16.mxu0 0
  %210 = vmatpush1.bf16.msra.mxu0 %v200
  %211 = vmatprep.subr.bf16.mxu0 0
  %212 = vmatpush1.bf16.msra.mxu0 %v199
  %213 = vmatprep.subr.bf16.mxu0 0
  %214 = vmatpush1.bf16.msra.mxu0 %v198
  %215 = vmatprep.subr.bf16.mxu0 0
  %216 = vmatpush1.bf16.msra.mxu0 %v197
  %217 = vmatprep.subr.bf16.mxu0 0
  %218 = vmatpush1.bf16.msra.mxu0 %v196
  %219 = vmatprep.subr.bf16.mxu0 0
  %220 = vmatpush1.bf16.msra.mxu0 %v195
  %221 = vmatprep.subr.bf16.mxu0 0
  %222 = vmatpush1.bf16.msra.mxu0 %v194
  %223 = vmatprep.subr.bf16.mxu0 0
  %224 = vmatpush1.bf16.msra.mxu0 %v193
  %225 = vmatprep.subr.bf16.mxu0 0
  %226 = vmatpush2.bf16.msra.mxu0 0
  %227 = vmatprep.subr.bf16.mxu0 0
  %228 = vmatpush2.bf16.msra.mxu0 0
  %229 = vmatprep.subr.bf16.mxu0 0
  %230 = vmatpush2.bf16.msra.mxu0 0
  %231 = vmatprep.subr.bf16.mxu0 0
  %232 = vmatpush2.bf16.msra.mxu0 0
  %233 = vmatprep.subr.bf16.mxu0 0
  %234 = vmatpush2.bf16.msra.mxu0 0
  %235 = vmatprep.subr.bf16.mxu0 0
  %236 = vmatpush2.bf16.msra.mxu0 0
  %237 = vmatprep.subr.bf16.mxu0 0
  %238 = vmatpush2.bf16.msra.mxu0 0
  %239 = vmatprep.subr.bf16.mxu0 0
  %240 = vmatpush2.bf16.msra.mxu0 0
  %241 = vmatprep.mubr.bf16.mxu0 0
  %242 = vmatmul.mubr.bf16.gmra.mxu0 %v135
  %v243 = vpop.f32.mrf.mxu0
  %v244 = vadd.f32 %v159, %v243
  %v245 = vpop.f32.mrf.mxu0
  %v246 = vpop.f32.mrf.mxu0
  %v247 = vpop.f32.mrf.mxu0
  %248 = vdwg.mxu0
  %v249 = vpack.c.bf16 %v244, %v244
  %v250 = vtanh.bf16.pop %v249
  %v251 = vunpack.c.l.bf16 %v250
  %v252 = vadd.f32 %v251, %v22
  %v253 = vpack.c.bf16 %v252, %v252
  %s254 = scalar_lea.vmem %s1, 128
  %v255 = vld [vmem:[%s254] sm:$0xf]
  %v256 = vld [vmem:[%s254 + $0x4] sm:$0xf]
  %v257 = vld [vmem:[%s254 + $0x8] sm:$0xf]
  %v258 = vld [vmem:[%s254 + $0xc] sm:$0xf]
  %v259 = vld [vmem:[%s254 + $0x10] sm:$0xf]
  %v260 = vld [vmem:[%s254 + $0x14] sm:$0xf]
  %v261 = vld [vmem:[%s254 + $0x18] sm:$0xf]
  %v262 = vld [vmem:[%s254 + $0x1c] sm:$0xf]
  %v263 = vld [vmem:[%s254 + $0x20] sm:$0xf]
  %v264 = vld [vmem:[%s254 + $0x24] sm:$0xf]
  %v265 = vld [vmem:[%s254 + $0x28] sm:$0xf]
  %v266 = vld [vmem:[%s254 + $0x2c] sm:$0xf]
  %v267 = vld [vmem:[%s254 + $0x30] sm:$0xf]
  %v268 = vld [vmem:[%s254 + $0x34] sm:$0xf]
  %v269 = vld [vmem:[%s254 + $0x38] sm:$0xf]
  %v270 = vld [vmem:[%s254 + $0x3c] sm:$0xf]
  %s271 = scalar_lea.vmem %s2, 2
  %v272 = vld [vmem:[%s271] sm:$0x1]
  %v274 = vlaneseq
  %v275 = vshrl.u32 %v274, 7
  %v276 = vsub.s32 0, %v275
  %v277 = vrot.slane %v272, %v276
  %v295 = vunpack.c.l.b16 %v255
  %v296 = vunpack.c.l.b16 %v256
  %v297 = vunpack.c.l.b16 %v257
  %v298 = vunpack.c.l.b16 %v258
  %v299 = vunpack.c.l.b16 %v259
  %v300 = vunpack.c.l.b16 %v260
  %v301 = vunpack.c.l.b16 %v261
  %v302 = vunpack.c.l.b16 %v262
  %v303 = vunpack.c.l.b16 %v263
  %v304 = vunpack.c.l.b16 %v264
  %v305 = vunpack.c.l.b16 %v265
  %v306 = vunpack.c.l.b16 %v266
  %v307 = vunpack.c.l.b16 %v267
  %v308 = vunpack.c.l.b16 %v268
  %v309 = vunpack.c.l.b16 %v269
  %v310 = vunpack.c.l.b16 %v270
  %v311 = vpack.c.b16 %v296, %v295
  %v312 = vpack.c.b16 %v298, %v297
  %v313 = vpack.c.b16 %v300, %v299
  %v314 = vpack.c.b16 %v302, %v301
  %v315 = vpack.c.b16 %v304, %v303
  %v316 = vpack.c.b16 %v306, %v305
  %v317 = vpack.c.b16 %v308, %v307
  %v318 = vpack.c.b16 %v310, %v309
  %327 = vmatprep.subr.bf16.mxu0 0
  %328 = vmatpush1.bf16.msra.mxu0 %v318
  %329 = vmatprep.subr.bf16.mxu0 0
  %330 = vmatpush1.bf16.msra.mxu0 %v317
  %331 = vmatprep.subr.bf16.mxu0 0
  %332 = vmatpush1.bf16.msra.mxu0 %v316
  %333 = vmatprep.subr.bf16.mxu0 0
  %334 = vmatpush1.bf16.msra.mxu0 %v315
  %335 = vmatprep.subr.bf16.mxu0 0
  %336 = vmatpush1.bf16.msra.mxu0 %v314
  %337 = vmatprep.subr.bf16.mxu0 0
  %338 = vmatpush1.bf16.msra.mxu0 %v313
  %339 = vmatprep.subr.bf16.mxu0 0
  %340 = vmatpush1.bf16.msra.mxu0 %v312
  %341 = vmatprep.subr.bf16.mxu0 0
  %342 = vmatpush1.bf16.msra.mxu0 %v311
  %343 = vmatprep.subr.bf16.mxu0 0
  %344 = vmatpush2.bf16.msra.mxu0 0
  %345 = vmatprep.subr.bf16.mxu0 0
  %346 = vmatpush2.bf16.msra.mxu0 0
  %347 = vmatprep.subr.bf16.mxu0 0
  %348 = vmatpush2.bf16.msra.mxu0 0
  %349 = vmatprep.subr.bf16.mxu0 0
  %350 = vmatpush2.bf16.msra.mxu0 0
  %351 = vmatprep.subr.bf16.mxu0 0
  %352 = vmatpush2.bf16.msra.mxu0 0
  %353 = vmatprep.subr.bf16.mxu0 0
  %354 = vmatpush2.bf16.msra.mxu0 0
  %355 = vmatprep.subr.bf16.mxu0 0
  %356 = vmatpush2.bf16.msra.mxu0 0
  %357 = vmatprep.subr.bf16.mxu0 0
  %358 = vmatpush2.bf16.msra.mxu0 0
  %359 = vmatprep.mubr.bf16.mxu0 0
  %360 = vmatmul.mubr.bf16.gmra.mxu0 %v253
  %v361 = vpop.f32.mrf.mxu0
  %v362 = vadd.f32 %v277, %v361
  %v363 = vpop.f32.mrf.mxu0
  %v364 = vpop.f32.mrf.mxu0
  %v365 = vpop.f32.mrf.mxu0
  %366 = vdwg.mxu0
  %v367 = vpack.c.bf16 %v362, %v362
  %v368 = vtanh.bf16.pop %v367
  %s369 = scalar_lea.vmem %s1, 192
  %v370 = vld [vmem:[%s369] sm:$0xf]
  %v371 = vld [vmem:[%s369 + $0x4] sm:$0xf]
  %v372 = vld [vmem:[%s369 + $0x8] sm:$0xf]
  %v373 = vld [vmem:[%s369 + $0xc] sm:$0xf]
  %v374 = vld [vmem:[%s369 + $0x10] sm:$0xf]
  %v375 = vld [vmem:[%s369 + $0x14] sm:$0xf]
  %v376 = vld [vmem:[%s369 + $0x18] sm:$0xf]
  %v377 = vld [vmem:[%s369 + $0x1c] sm:$0xf]
  %v378 = vld [vmem:[%s369 + $0x20] sm:$0xf]
  %v379 = vld [vmem:[%s369 + $0x24] sm:$0xf]
  %v380 = vld [vmem:[%s369 + $0x28] sm:$0xf]
  %v381 = vld [vmem:[%s369 + $0x2c] sm:$0xf]
  %v382 = vld [vmem:[%s369 + $0x30] sm:$0xf]
  %v383 = vld [vmem:[%s369 + $0x34] sm:$0xf]
  %v384 = vld [vmem:[%s369 + $0x38] sm:$0xf]
  %v385 = vld [vmem:[%s369 + $0x3c] sm:$0xf]
  %s386 = scalar_lea.vmem %s2, 3
  %v387 = vld [vmem:[%s386] sm:$0x1]
  %v389 = vlaneseq
  %v390 = vshrl.u32 %v389, 7
  %v391 = vsub.s32 0, %v390
  %v392 = vrot.slane %v387, %v391
  %v410 = vunpack.c.l.b16 %v370
  %v411 = vunpack.c.l.b16 %v371
  %v412 = vunpack.c.l.b16 %v372
  %v413 = vunpack.c.l.b16 %v373
  %v414 = vunpack.c.l.b16 %v374
  %v415 = vunpack.c.l.b16 %v375
  %v416 = vunpack.c.l.b16 %v376
  %v417 = vunpack.c.l.b16 %v377
  %v418 = vunpack.c.l.b16 %v378
  %v419 = vunpack.c.l.b16 %v379
  %v420 = vunpack.c.l.b16 %v380
  %v421 = vunpack.c.l.b16 %v381
  %v422 = vunpack.c.l.b16 %v382
  %v423 = vunpack.c.l.b16 %v383
  %v424 = vunpack.c.l.b16 %v384
  %v425 = vunpack.c.l.b16 %v385
  %v426 = vpack.c.b16 %v411, %v410
  %v427 = vpack.c.b16 %v413, %v412
  %v428 = vpack.c.b16 %v415, %v414
  %v429 = vpack.c.b16 %v417, %v416
  %v430 = vpack.c.b16 %v419, %v418
  %v431 = vpack.c.b16 %v421, %v420
  %v432 = vpack.c.b16 %v423, %v422
  %v433 = vpack.c.b16 %v425, %v424
  %442 = vmatprep.subr.bf16.mxu0 0
  %443 = vmatpush1.bf16.msra.mxu0 %v433
  %444 = vmatprep.subr.bf16.mxu0 0
  %445 = vmatpush1.bf16.msra.mxu0 %v432
  %446 = vmatprep.subr.bf16.mxu0 0
  %447 = vmatpush1.bf16.msra.mxu0 %v431
  %448 = vmatprep.subr.bf16.mxu0 0
  %449 = vmatpush1.bf16.msra.mxu0 %v430
  %450 = vmatprep.subr.bf16.mxu0 0
  %451 = vmatpush1.bf16.msra.mxu0 %v429
  %452 = vmatprep.subr.bf16.mxu0 0
  %453 = vmatpush1.bf16.msra.mxu0 %v428
  %454 = vmatprep.subr.bf16.mxu0 0
  %455 = vmatpush1.bf16.msra.mxu0 %v427
  %456 = vmatprep.subr.bf16.mxu0 0
  %457 = vmatpush1.bf16.msra.mxu0 %v426
  %458 = vmatprep.subr.bf16.mxu0 0
  %459 = vmatpush2.bf16.msra.mxu0 0
  %460 = vmatprep.subr.bf16.mxu0 0
  %461 = vmatpush2.bf16.msra.mxu0 0
  %462 = vmatprep.subr.bf16.mxu0 0
  %463 = vmatpush2.bf16.msra.mxu0 0
  %464 = vmatprep.subr.bf16.mxu0 0
  %465 = vmatpush2.bf16.msra.mxu0 0
  %466 = vmatprep.subr.bf16.mxu0 0
  %467 = vmatpush2.bf16.msra.mxu0 0
  %468 = vmatprep.subr.bf16.mxu0 0
  %469 = vmatpush2.bf16.msra.mxu0 0
  %470 = vmatprep.subr.bf16.mxu0 0
  %471 = vmatpush2.bf16.msra.mxu0 0
  %472 = vmatprep.subr.bf16.mxu0 0
  %473 = vmatpush2.bf16.msra.mxu0 0
  %474 = vmatprep.mubr.bf16.mxu0 0
  %475 = vmatmul.mubr.bf16.gmra.mxu0 %v368
  %v476 = vpop.f32.mrf.mxu0
  %v477 = vadd.f32 %v392, %v476
  %v478 = vpop.f32.mrf.mxu0
  %v479 = vpop.f32.mrf.mxu0
  %v480 = vpop.f32.mrf.mxu0
  %481 = vdwg.mxu0
  %v482 = vpack.c.bf16 %v477, %v477
  %v483 = vtanh.bf16.pop %v482
  %v484 = vunpack.c.l.bf16 %v483
  %v485 = vadd.f32 %v484, %v252
  %v486 = vpack.c.bf16 %v485, %v485
  %s487 = scalar_lea.vmem %s1, 256
  %v488 = vld [vmem:[%s487] sm:$0xf]
  %v489 = vld [vmem:[%s487 + $0x4] sm:$0xf]
  %v490 = vld [vmem:[%s487 + $0x8] sm:$0xf]
  %v491 = vld [vmem:[%s487 + $0xc] sm:$0xf]
  %v492 = vld [vmem:[%s487 + $0x10] sm:$0xf]
  %v493 = vld [vmem:[%s487 + $0x14] sm:$0xf]
  %v494 = vld [vmem:[%s487 + $0x18] sm:$0xf]
  %v495 = vld [vmem:[%s487 + $0x1c] sm:$0xf]
  %v496 = vld [vmem:[%s487 + $0x20] sm:$0xf]
  %v497 = vld [vmem:[%s487 + $0x24] sm:$0xf]
  %v498 = vld [vmem:[%s487 + $0x28] sm:$0xf]
  %v499 = vld [vmem:[%s487 + $0x2c] sm:$0xf]
  %v500 = vld [vmem:[%s487 + $0x30] sm:$0xf]
  %v501 = vld [vmem:[%s487 + $0x34] sm:$0xf]
  %v502 = vld [vmem:[%s487 + $0x38] sm:$0xf]
  %v503 = vld [vmem:[%s487 + $0x3c] sm:$0xf]
  %s504 = scalar_lea.vmem %s2, 4
  %v505 = vld [vmem:[%s504] sm:$0x1]
  %v507 = vlaneseq
  %v508 = vshrl.u32 %v507, 7
  %v509 = vsub.s32 0, %v508
  %v510 = vrot.slane %v505, %v509
  %v528 = vunpack.c.l.b16 %v488
  %v529 = vunpack.c.l.b16 %v489
  %v530 = vunpack.c.l.b16 %v490
  %v531 = vunpack.c.l.b16 %v491
  %v532 = vunpack.c.l.b16 %v492
  %v533 = vunpack.c.l.b16 %v493
  %v534 = vunpack.c.l.b16 %v494
  %v535 = vunpack.c.l.b16 %v495
  %v536 = vunpack.c.l.b16 %v496
  %v537 = vunpack.c.l.b16 %v497
  %v538 = vunpack.c.l.b16 %v498
  %v539 = vunpack.c.l.b16 %v499
  %v540 = vunpack.c.l.b16 %v500
  %v541 = vunpack.c.l.b16 %v501
  %v542 = vunpack.c.l.b16 %v502
  %v543 = vunpack.c.l.b16 %v503
  %v544 = vpack.c.b16 %v529, %v528
  %v545 = vpack.c.b16 %v531, %v530
  %v546 = vpack.c.b16 %v533, %v532
  %v547 = vpack.c.b16 %v535, %v534
  %v548 = vpack.c.b16 %v537, %v536
  %v549 = vpack.c.b16 %v539, %v538
  %v550 = vpack.c.b16 %v541, %v540
  %v551 = vpack.c.b16 %v543, %v542
  %560 = vmatprep.subr.bf16.mxu0 0
  %561 = vmatpush1.bf16.msra.mxu0 %v551
  %562 = vmatprep.subr.bf16.mxu0 0
  %563 = vmatpush1.bf16.msra.mxu0 %v550
  %564 = vmatprep.subr.bf16.mxu0 0
  %565 = vmatpush1.bf16.msra.mxu0 %v549
  %566 = vmatprep.subr.bf16.mxu0 0
  %567 = vmatpush1.bf16.msra.mxu0 %v548
  %568 = vmatprep.subr.bf16.mxu0 0
  %569 = vmatpush1.bf16.msra.mxu0 %v547
  %570 = vmatprep.subr.bf16.mxu0 0
  %571 = vmatpush1.bf16.msra.mxu0 %v546
  %572 = vmatprep.subr.bf16.mxu0 0
  %573 = vmatpush1.bf16.msra.mxu0 %v545
  %574 = vmatprep.subr.bf16.mxu0 0
  %575 = vmatpush1.bf16.msra.mxu0 %v544
  %576 = vmatprep.subr.bf16.mxu0 0
  %577 = vmatpush2.bf16.msra.mxu0 0
  %578 = vmatprep.subr.bf16.mxu0 0
  %579 = vmatpush2.bf16.msra.mxu0 0
  %580 = vmatprep.subr.bf16.mxu0 0
  %581 = vmatpush2.bf16.msra.mxu0 0
  %582 = vmatprep.subr.bf16.mxu0 0
  %583 = vmatpush2.bf16.msra.mxu0 0
  %584 = vmatprep.subr.bf16.mxu0 0
  %585 = vmatpush2.bf16.msra.mxu0 0
  %586 = vmatprep.subr.bf16.mxu0 0
  %587 = vmatpush2.bf16.msra.mxu0 0
  %588 = vmatprep.subr.bf16.mxu0 0
  %589 = vmatpush2.bf16.msra.mxu0 0
  %590 = vmatprep.subr.bf16.mxu0 0
  %591 = vmatpush2.bf16.msra.mxu0 0
  %592 = vmatprep.mubr.bf16.mxu0 0
  %593 = vmatmul.mubr.bf16.gmra.mxu0 %v486
  %v594 = vpop.f32.mrf.mxu0
  %v595 = vadd.f32 %v510, %v594
  %v596 = vpop.f32.mrf.mxu0
  %v597 = vpop.f32.mrf.mxu0
  %v598 = vpop.f32.mrf.mxu0
  %599 = vdwg.mxu0
  %v600 = vpack.c.bf16 %v595, %v595
  %v601 = vtanh.bf16.pop %v600
  %s602 = scalar_lea.vmem %s1, 320
  %v603 = vld [vmem:[%s602] sm:$0xf]
  %v604 = vld [vmem:[%s602 + $0x4] sm:$0xf]
  %v605 = vld [vmem:[%s602 + $0x8] sm:$0xf]
  %v606 = vld [vmem:[%s602 + $0xc] sm:$0xf]
  %v607 = vld [vmem:[%s602 + $0x10] sm:$0xf]
  %v608 = vld [vmem:[%s602 + $0x14] sm:$0xf]
  %v609 = vld [vmem:[%s602 + $0x18] sm:$0xf]
  %v610 = vld [vmem:[%s602 + $0x1c] sm:$0xf]
  %v611 = vld [vmem:[%s602 + $0x20] sm:$0xf]
  %v612 = vld [vmem:[%s602 + $0x24] sm:$0xf]
  %v613 = vld [vmem:[%s602 + $0x28] sm:$0xf]
  %v614 = vld [vmem:[%s602 + $0x2c] sm:$0xf]
  %v615 = vld [vmem:[%s602 + $0x30] sm:$0xf]
  %v616 = vld [vmem:[%s602 + $0x34] sm:$0xf]
  %v617 = vld [vmem:[%s602 + $0x38] sm:$0xf]
  %v618 = vld [vmem:[%s602 + $0x3c] sm:$0xf]
  %s619 = scalar_lea.vmem %s2, 5
  %v620 = vld [vmem:[%s619] sm:$0x1]
  %v622 = vlaneseq
  %v623 = vshrl.u32 %v622, 7
  %v624 = vsub.s32 0, %v623
  %v625 = vrot.slane %v620, %v624
  %v643 = vunpack.c.l.b16 %v603
  %v644 = vunpack.c.l.b16 %v604
  %v645 = vunpack.c.l.b16 %v605
  %v646 = vunpack.c.l.b16 %v606
  %v647 = vunpack.c.l.b16 %v607
  %v648 = vunpack.c.l.b16 %v608
  %v649 = vunpack.c.l.b16 %v609
  %v650 = vunpack.c.l.b16 %v610
  %v651 = vunpack.c.l.b16 %v611
  %v652 = vunpack.c.l.b16 %v612
  %v653 = vunpack.c.l.b16 %v613
  %v654 = vunpack.c.l.b16 %v614
  %v655 = vunpack.c.l.b16 %v615
  %v656 = vunpack.c.l.b16 %v616
  %v657 = vunpack.c.l.b16 %v617
  %v658 = vunpack.c.l.b16 %v618
  %v659 = vpack.c.b16 %v644, %v643
  %v660 = vpack.c.b16 %v646, %v645
  %v661 = vpack.c.b16 %v648, %v647
  %v662 = vpack.c.b16 %v650, %v649
  %v663 = vpack.c.b16 %v652, %v651
  %v664 = vpack.c.b16 %v654, %v653
  %v665 = vpack.c.b16 %v656, %v655
  %v666 = vpack.c.b16 %v658, %v657
  %675 = vmatprep.subr.bf16.mxu0 0
  %676 = vmatpush1.bf16.msra.mxu0 %v666
  %677 = vmatprep.subr.bf16.mxu0 0
  %678 = vmatpush1.bf16.msra.mxu0 %v665
  %679 = vmatprep.subr.bf16.mxu0 0
  %680 = vmatpush1.bf16.msra.mxu0 %v664
  %681 = vmatprep.subr.bf16.mxu0 0
  %682 = vmatpush1.bf16.msra.mxu0 %v663
  %683 = vmatprep.subr.bf16.mxu0 0
  %684 = vmatpush1.bf16.msra.mxu0 %v662
  %685 = vmatprep.subr.bf16.mxu0 0
  %686 = vmatpush1.bf16.msra.mxu0 %v661
  %687 = vmatprep.subr.bf16.mxu0 0
  %688 = vmatpush1.bf16.msra.mxu0 %v660
  %689 = vmatprep.subr.bf16.mxu0 0
  %690 = vmatpush1.bf16.msra.mxu0 %v659
  %691 = vmatprep.subr.bf16.mxu0 0
  %692 = vmatpush2.bf16.msra.mxu0 0
  %693 = vmatprep.subr.bf16.mxu0 0
  %694 = vmatpush2.bf16.msra.mxu0 0
  %695 = vmatprep.subr.bf16.mxu0 0
  %696 = vmatpush2.bf16.msra.mxu0 0
  %697 = vmatprep.subr.bf16.mxu0 0
  %698 = vmatpush2.bf16.msra.mxu0 0
  %699 = vmatprep.subr.bf16.mxu0 0
  %700 = vmatpush2.bf16.msra.mxu0 0
  %701 = vmatprep.subr.bf16.mxu0 0
  %702 = vmatpush2.bf16.msra.mxu0 0
  %703 = vmatprep.subr.bf16.mxu0 0
  %704 = vmatpush2.bf16.msra.mxu0 0
  %705 = vmatprep.subr.bf16.mxu0 0
  %706 = vmatpush2.bf16.msra.mxu0 0
  %707 = vmatprep.mubr.bf16.mxu0 0
  %708 = vmatmul.mubr.bf16.gmra.mxu0 %v601
  %v709 = vpop.f32.mrf.mxu0
  %v710 = vadd.f32 %v625, %v709
  %v711 = vpop.f32.mrf.mxu0
  %v712 = vpop.f32.mrf.mxu0
  %v713 = vpop.f32.mrf.mxu0
  %714 = vdwg.mxu0
  %v715 = vpack.c.bf16 %v710, %v710
  %v716 = vtanh.bf16.pop %v715
  %v717 = vunpack.c.l.bf16 %v716
  %v718 = vadd.f32 %v717, %v485
  %v719 = vld [vmem:[%s3] sm:$0xff]
  %v720 = vld [vmem:[%s4] sm:$0xff]
  %722 = vset.pattern.permute.xlu0 0
  %723 = vperm.xlu0 %722, %v720
  %v724 = vpop.permute.xlu0 %723
  %726 = vmatprep.subr.mxu0 0.0
  %727 = vmatpush1.xpose.msra.mxu0 0.0
  %728 = vmatprep.subr.mxu0 0.0
  %729 = vmatpush1.xpose.msra.mxu0 0.0
  %730 = vmatprep.subr.mxu0 0.0
  %731 = vmatpush1.xpose.msra.mxu0 0.0
  %732 = vmatprep.subr.mxu0 0.0
  %733 = vmatpush1.xpose.msra.mxu0 0.0
  %734 = vmatprep.subr.mxu0 0.0
  %735 = vmatpush1.xpose.msra.mxu0 0.0
  %736 = vmatprep.subr.mxu0 0.0
  %737 = vmatpush1.xpose.msra.mxu0 0.0
  %738 = vmatprep.subr.mxu0 0.0
  %739 = vmatpush1.xpose.msra.mxu0 0.0
  %740 = vmatprep.subr.mxu0 0.0
  %741 = vmatpush1.xpose.msra.mxu0 0.0
  %742 = vmatprep.subr.mxu0 0.0
  %743 = vmatpush1.xpose.msra.mxu0 0.0
  %744 = vmatprep.subr.mxu0 0.0
  %745 = vmatpush1.xpose.msra.mxu0 0.0
  %746 = vmatprep.subr.mxu0 0.0
  %747 = vmatpush1.xpose.msra.mxu0 0.0
  %748 = vmatprep.subr.mxu0 0.0
  %749 = vmatpush1.xpose.msra.mxu0 0.0
  %750 = vmatprep.subr.mxu0 0.0
  %751 = vmatpush1.xpose.msra.mxu0 0.0
  %752 = vmatprep.subr.mxu0 0.0
  %753 = vmatpush1.xpose.msra.mxu0 0.0
  %754 = vmatprep.subr.mxu0 0.0
  %755 = vmatpush1.xpose.msra.mxu0 0.0
  %756 = vmatprep.subr.mxu0 0.0
  %757 = vmatpush1.xpose.msra.mxu0 %v718
  %758 = vmatprep.subr.mxu0 0.0
  %759 = vmatpush2.xpose.msra.mxu0 0.0
  %760 = vmatprep.subr.mxu0 0.0
  %761 = vmatpush2.xpose.msra.mxu0 0.0
  %762 = vmatprep.subr.mxu0 0.0
  %763 = vmatpush2.xpose.msra.mxu0 0.0
  %764 = vmatprep.subr.mxu0 0.0
  %765 = vmatpush2.xpose.msra.mxu0 0.0
  %766 = vmatprep.subr.mxu0 0.0
  %767 = vmatpush2.xpose.msra.mxu0 0.0
  %768 = vmatprep.subr.mxu0 0.0
  %769 = vmatpush2.xpose.msra.mxu0 0.0
  %770 = vmatprep.subr.mxu0 0.0
  %771 = vmatpush2.xpose.msra.mxu0 0.0
  %772 = vmatprep.subr.mxu0 0.0
  %773 = vmatpush2.xpose.msra.mxu0 0.0
  %774 = vmatprep.subr.mxu0 0.0
  %775 = vmatpush2.xpose.msra.mxu0 0.0
  %776 = vmatprep.subr.mxu0 0.0
  %777 = vmatpush2.xpose.msra.mxu0 0.0
  %778 = vmatprep.subr.mxu0 0.0
  %779 = vmatpush2.xpose.msra.mxu0 0.0
  %780 = vmatprep.subr.mxu0 0.0
  %781 = vmatpush2.xpose.msra.mxu0 0.0
  %782 = vmatprep.subr.mxu0 0.0
  %783 = vmatpush2.xpose.msra.mxu0 0.0
  %784 = vmatprep.subr.mxu0 0.0
  %785 = vmatpush2.xpose.msra.mxu0 0.0
  %786 = vmatprep.subr.mxu0 0.0
  %787 = vmatpush2.xpose.msra.mxu0 0.0
  %788 = vmatprep.subr.mxu0 0.0
  %789 = vmatpush2.xpose.msra.mxu0 0.0
  %790 = vmatprep.mubr.f32.mxu0 0.0
  %791 = vmatmul.mubr.f32.gmra.mxu0 %v719
  %v792 = vpop.f32.mrf.mxu0
  %v793 = vadd.f32 %v724, %v792
  %v794 = vpop.f32.mrf.mxu0
  %795 = vdwg.mxu0
  %vm796 = vcmask 64512
  %797 = vst.msk [vmem:[%s5] sm:$0xff] %vm796, %v793
  // Predicated region
  $region22: #{dense_resnet_forward.1} parent=0 // pred_check
    _
  $region23: #{dense_resnet_forward.1} parent=0 // pred_check_branch
    %799 = sbr.rel (0) target = $region25
  $region24: #{dense_resnet_forward.1} parent=0 // pred_region
    _
  $region25: #{dense_resnet_forward.1} parent=0 // pred_fallthru
    _
  // Predicated region
  $region26: #{dense_resnet_forward.1} parent=0 // pred_check
    _
  $region27: #{dense_resnet_forward.1} parent=0 // pred_check_branch
    %801 = sbr.rel (0) target = $region29
  $region28: #{dense_resnet_forward.1} parent=0 // pred_region
    _
  $region29: #{dense_resnet_forward.1} parent=0 // pred_fallthru
    _

</llo_original>
